<compile_context>
chip_gen: v7x
topology: tpu7x:2x2x1
jax: 0.10.0
libtpu: 0.0.40
codegen_flags: <defaults>
</compile_context>

<pallas_src>
import functools

import jax
import jax.numpy as jnp
from jax.experimental import pallas as pl
from jax.experimental.pallas import tpu as pltpu

LANES = 128
# ~2 MiB per input block: past the ~85% roofline knee; 2 inputs x 2 pipeline
# buffers + f32 upcast temporaries stay comfortably under 32 MiB scoped VMEM.
DEFAULT_BLOCK_BYTES = 2 * 1024 * 1024
NUM_CORES = 2                      # v7x TensorCores; harmless elsewhere
VMEM_LIMIT_BYTES = 32 * 1024 * 1024


def _dice_kernel(p_ref, t_ref, out_ref, *, blocks_per_core, total_blocks,
                 valid_rows, tile_rows, ragged):
    c = pl.program_id(0)            # TensorCore split ("parallel")
    i = pl.program_id(1)            # per-core block stream ("arbitrary")
    g = c * blocks_per_core + i     # global block id (un-clamped)

    # The per-core accumulator is the revisited output block itself.
    @pl.when(i == 0)
    def _():
        out_ref[...] = jnp.zeros_like(out_ref)

    def _accumulate(p, t):
        # Per-lane partial sums (VPU adds); the cross-lane reduce over the
        # tiny (num_cores, 2, 128) result happens in the wrapper.
        pt = jnp.sum(p * t, axis=0, keepdims=True)   # (1, LANES)
        ps = jnp.sum(p + t, axis=0, keepdims=True)   # (1, LANES)
        out_ref[...] += jnp.concatenate([pt, ps], axis=0)[None]
        # TODO(synk): if v7x profiling still shows the VALU slot saturating,
        # move the axis-0 reductions onto the MXU via ones(1,R) @ [p*t | p+t].

    last_real_block = total_blocks - 1

    if ragged:
        # Steady state: fully-valid blocks, zero masking work.
        @pl.when(g < last_real_block)
        def _():
            _accumulate(p_ref[...].astype(jnp.float32),
                        t_ref[...].astype(jnp.float32))

        # Final ragged block only: rows past the valid extent are undefined
        # (stale VMEM) and must be zeroed before feeding the sums.
        @pl.when(g == last_real_block)
        def _():
            p = p_ref[...].astype(jnp.float32)
            t = t_ref[...].astype(jnp.float32)
            row_ids = last_real_block * tile_rows + jax.lax.broadcasted_iota(
                jnp.int32, (tile_rows, LANES), 0)
            valid = row_ids < valid_rows
            p = jnp.where(valid, p, 0.0)
            t = jnp.where(valid, t, 0.0)
            _accumulate(p, t)
    else:
        # g >= total_blocks only for the clamped duplicate block of the last
        # core when total_blocks is odd -- skip its contribution entirely.
        @pl.when(g < total_blocks)
        def _():
            _accumulate(p_ref[...].astype(jnp.float32),
                        t_ref[...].astype(jnp.float32))


def dice_loss(pred, target, smooth=1.0, *, block_bytes=DEFAULT_BLOCK_BYTES):
    assert pred.shape == target.shape

    p = jnp.ravel(pred)
    t = jnp.ravel(target)
    n = p.shape[0]

    rows = n // LANES
    n_main = rows * LANES

    # <128-element lane remainder: tiny plain-JAX sums (no jnp.pad, so no
    # full-array HBM copies before the kernel runs).
    if n_main < n:
        p_rem = p[n_main:].astype(jnp.float32)
        t_rem = t[n_main:].astype(jnp.float32)
        intersection = jnp.sum(p_rem * t_rem)
        denominator = jnp.sum(p_rem) + jnp.sum(t_rem)
    else:
        intersection = jnp.float32(0.0)
        denominator = jnp.float32(0.0)

    if rows > 0:
        p2 = p[:n_main].reshape(rows, LANES)
        t2 = t[:n_main].reshape(rows, LANES)

        # Byte-budget tile: identical step count for f32 / bf16 inputs.
        itemsize = max(p2.dtype.itemsize, t2.dtype.itemsize)
        sub = 8 * max(1, 4 // itemsize)           # sublane packing multiple
        budget_rows = max(sub, (block_bytes // (LANES * itemsize)) // sub * sub)
        tile_rows = rows if rows <= budget_rows else budget_rows

        total_blocks = pl.cdiv(rows, tile_rows)
        num_cores = NUM_CORES if total_blocks >= NUM_CORES else 1
        blocks_per_core = pl.cdiv(total_blocks, num_cores)
        need_clamp = num_cores * blocks_per_core > total_blocks
        ragged = (rows % tile_rows) != 0

        def in_index_map(c, i):
            g = c * blocks_per_core + i
            if need_clamp:
                g = jnp.minimum(g, total_blocks - 1)  # duplicate block; kernel skips it
            return (g, 0)

        kernel = functools.partial(
            _dice_kernel,
            blocks_per_core=blocks_per_core,
            total_blocks=total_blocks,
            valid_rows=rows,
            tile_rows=tile_rows,
            ragged=ragged,
        )

        partials = pl.pallas_call(
            kernel,
            out_shape=jax.ShapeDtypeStruct((num_cores, 2, LANES), jnp.float32),
            grid_spec=pltpu.PrefetchScalarGridSpec(
                num_scalar_prefetch=0,
                grid=(num_cores, blocks_per_core),
                in_specs=[
                    pl.BlockSpec((tile_rows, LANES), in_index_map),
                    pl.BlockSpec((tile_rows, LANES), in_index_map),
                ],
                out_specs=pl.BlockSpec((1, 2, LANES), lambda c, i: (c, 0, 0)),
            ),
            compiler_params=pltpu.CompilerParams(
                dimension_semantics=("parallel", "arbitrary"),
                vmem_limit_bytes=VMEM_LIMIT_BYTES,
            ),
            cost_estimate=pl.CostEstimate(
                flops=4 * n_main,
                transcendentals=0,
                bytes_accessed=n_main * (p2.dtype.itemsize + t2.dtype.itemsize),
            ),
        )(p2, t2)

        intersection = intersection + jnp.sum(partials[:, 0, :])
        denominator = denominator + jnp.sum(partials[:, 1, :])

    dice_score = (2.0 * intersection + float(smooth)) / (denominator + float(smooth))
    return 1.0 - dice_score


def _ref_dice_loss(pred, target, smooth=1.0):
    pred = pred.astype(jnp.float32)
    target = target.astype(jnp.float32)
    inter = jnp.sum(pred * target)
    denom = jnp.sum(pred) + jnp.sum(target)
    return 1.0 - (2.0 * inter + smooth) / (denom + smooth)


if __name__ == "__main__":
    key = jax.random.PRNGKey(0)
    k1, k2, k3, k4, k5, k6 = jax.random.split(key, 6)

    # 1) Segmentation-style NCHW inputs: (batch=2, channels=4, 16x16 spatial).
    pred = jax.nn.sigmoid(jax.random.normal(k1, (2, 4, 16, 16), dtype=jnp.float32))
    target = (jax.random.uniform(k2, (2, 4, 16, 16)) > 0.5).astype(jnp.float32)
    out = jax.block_until_ready(dice_loss(pred, target, smooth=1.0))
    ref = _ref_dice_loss(pred, target, smooth=1.0)
    assert jnp.allclose(out, ref, atol=1e-6, rtol=1e-5), (out, ref)

    # 2) Non-128-aligned element count -> exercises the plain-JAX remainder path.
    pred2 = jax.nn.sigmoid(jax.random.normal(k3, (3, 5, 7, 9), dtype=jnp.float32))
    target2 = (jax.random.uniform(k4, (3, 5, 7, 9)) > 0.5).astype(jnp.float32)
    out2 = jax.block_until_ready(dice_loss(pred2, target2, smooth=1.0))
    ref2 = _ref_dice_loss(pred2, target2, smooth=1.0)
    assert jnp.allclose(out2, ref2, atol=1e-6, rtol=1e-5), (out2, ref2)

    # 3) Tiny forced block budget -> exercises multi-block grid, the 2-core
    #    split, the clamped duplicate block, and the ragged-tail mask.
    pred3 = jax.nn.sigmoid(jax.random.normal(k5, (2, 4, 16, 20), dtype=jnp.float32))
    target3 = (jax.random.uniform(k6, (2, 4, 16, 20)) > 0.5).astype(jnp.float32)
    out3 = jax.block_until_ready(
        dice_loss(pred3, target3, smooth=1.0, block_bytes=8 * LANES * 4))
    ref3 = _ref_dice_loss(pred3, target3, smooth=1.0)
    assert jnp.allclose(out3, ref3, atol=1e-6, rtol=1e-5), (out3, ref3)

    print("KERNEL_OK")
</pallas_src>

<mosaic_0001>
module attributes {stable_mosaic.version = 11 : i64} {
  func.func @_dice_kernel(%arg0: i32, %arg1: i32, %arg2: memref<16x128xf32, #tpu.memory_space<vmem>>, %arg3: memref<16x128xf32, #tpu.memory_space<vmem>>, %arg4: memref<1x2x128xf32, #tpu.memory_space<vmem>>) attributes {dimension_semantics = [#tpu.dimension_semantics<parallel>, #tpu.dimension_semantics<arbitrary>], iteration_bounds = array<i64: 1, 1>, scalar_prefetch = 0 : i64, scratch_operands = 0 : i64, tpu.core_type = #tpu.core_type<tc>, window_params = [{transform_indices = @transform_0, window_bounds = array<i64: 16, 128>}, {transform_indices = @transform_1, window_bounds = array<i64: 16, 128>}, {transform_indices = @transform_2, window_bounds = array<i64: 1, 2, 128>}]} {
    %c1_i32 = arith.constant 1 : i32
    %0 = arith.muli %arg0, %c1_i32 : i32
    %1 = arith.addi %0, %arg1 : i32
    %c0_i32 = arith.constant 0 : i32
    %2 = arith.cmpi eq, %arg1, %c0_i32 : i32
    %3 = arith.extui %2 : i1 to i32
    %c0_i32_0 = arith.constant 0 : i32
    %4 = arith.cmpi ne, %3, %c0_i32_0 : i32
    scf.if %4 {
      %cst = arith.constant 0.000000e+00 : f32
      %8 = vector.broadcast %cst : f32 to vector<1x2x128xf32>
      %c0 = arith.constant 0 : index
      %c0_3 = arith.constant 0 : index
      %c0_4 = arith.constant 0 : index
      %9 = vector.load %arg4[%c0, %c0_3, %c0_4] : memref<1x2x128xf32, #tpu.memory_space<vmem>>, vector<1x2x128xf32>
      tpu.vector_store %arg4[%c0, %c0_3, %c0_4], %8 {strides = array<i32>} : memref<1x2x128xf32, #tpu.memory_space<vmem>>, vector<1x2x128xf32>,
    } else {
    }
    %c1_i32_1 = arith.constant 1 : i32
    %5 = arith.cmpi slt, %1, %c1_i32_1 : i32
    %6 = arith.extui %5 : i1 to i32
    %c0_i32_2 = arith.constant 0 : i32
    %7 = arith.cmpi ne, %6, %c0_i32_2 : i32
    scf.if %7 {
      %c0 = arith.constant 0 : index
      %c0_3 = arith.constant 0 : index
      %8 = vector.load %arg2[%c0, %c0_3] : memref<16x128xf32, #tpu.memory_space<vmem>>, vector<16x128xf32>
      %c0_4 = arith.constant 0 : index
      %c0_5 = arith.constant 0 : index
      %9 = vector.load %arg3[%c0_4, %c0_5] : memref<16x128xf32, #tpu.memory_space<vmem>>, vector<16x128xf32>
      %10 = arith.mulf %8, %9 : vector<16x128xf32>
      %cst = arith.constant dense<0.000000e+00> : vector<128xf32>
      %11 = vector.multi_reduction <add>, %10, %cst [0] : vector<16x128xf32> to vector<128xf32>
      %12 = vector.shape_cast %11 : vector<128xf32> to vector<1x128xf32>
      %13 = arith.addf %8, %9 : vector<16x128xf32>
      %cst_6 = arith.constant dense<0.000000e+00> : vector<128xf32>
      %14 = vector.multi_reduction <add>, %13, %cst_6 [0] : vector<16x128xf32> to vector<128xf32>
      %15 = vector.shape_cast %14 : vector<128xf32> to vector<1x128xf32>
      %c0_7 = arith.constant 0 : index
      %c0_8 = arith.constant 0 : index
      %c0_9 = arith.constant 0 : index
      %16 = vector.load %arg4[%c0_7, %c0_8, %c0_9] : memref<1x2x128xf32, #tpu.memory_space<vmem>>, vector<1x2x128xf32>
      %17 = tpu.concatenate %12, %15 in 0 : vector<1x128xf32>, vector<1x128xf32> -> vector<2x128xf32>
      %18 = vector.shape_cast %17 : vector<2x128xf32> to vector<1x2x128xf32>
      %19 = arith.addf %16, %18 : vector<1x2x128xf32>
      %c0_10 = arith.constant 0 : index
      %c0_11 = arith.constant 0 : index
      %c0_12 = arith.constant 0 : index
      %20 = vector.load %arg4[%c0_10, %c0_11, %c0_12] : memref<1x2x128xf32, #tpu.memory_space<vmem>>, vector<1x2x128xf32>
      tpu.vector_store %arg4[%c0_10, %c0_11, %c0_12], %19 {strides = array<i32>} : memref<1x2x128xf32, #tpu.memory_space<vmem>>, vector<1x2x128xf32>,
    } else {
    }
    return
  }
  func.func @transform_0(%arg0: i32, %arg1: i32) -> (i32, i32) {
    %c1_i32 = arith.constant 1 : i32
    %0 = arith.muli %arg0, %c1_i32 : i32
    %1 = arith.addi %0, %arg1 : i32
    %c0_i32 = arith.constant 0 : i32
    %c0_i32_0 = arith.constant 0 : i32
    return %1, %c0_i32 : i32, i32
  }
  func.func @transform_1(%arg0: i32, %arg1: i32) -> (i32, i32) {
    %c1_i32 = arith.constant 1 : i32
    %0 = arith.muli %arg0, %c1_i32 : i32
    %1 = arith.addi %0, %arg1 : i32
    %c0_i32 = arith.constant 0 : i32
    %c0_i32_0 = arith.constant 0 : i32
    return %1, %c0_i32 : i32, i32
  }
  func.func @transform_2(%arg0: i32, %arg1: i32) -> (i32, i32, i32) {
    %c0_i32 = arith.constant 0 : i32
    %c0_i32_0 = arith.constant 0 : i32
    %c0_i32_1 = arith.constant 0 : i32
    return %arg0, %c0_i32, %c0_i32_0 : i32, i32, i32
  }
}

</mosaic_0001>

<llo_original>
// kernel: tpu_custom_call.1
$region0: #{tpu_custom_call.1}
  #allocation0 [shape = 'u32[]', space=smem, size = 0x4, offset = 0x4, fixed_abs, tag = 'smem constant byte address 0x4 - core index']
  #allocation1 [shape = 'u32[144,128]{1,0:T(1,128)}', space=vmem, size = 0x12000, scoped, tag = 'internal scratch']
  %s0 = inlined_call_operand.hbm [shape: f32[16,128], index: 0, kind: input, shape index: {}]
  %s1 = inlined_call_operand.hbm [shape: f32[16,128], index: 1, kind: input, shape index: {}]
  %s2 = inlined_call_operand.hbm [shape: f32[1,2,128], index: 2, kind: output, shape index: {}]
  %s3 = sld [smem:[#allocation0]]
  $region34: #{tpu_custom_call.1} parent=0
    _
  %s5 = ssub.s32 1, %s3
  %s6 = scalar_select 0, %s5, %s3
  $region1: #{tpu_custom_call.1} parent=0
    #allocation2 [shape = 'u8[8192]{0}', space=vmem, size = 0x2000, scoped, tag = 'input window, operand 0, single buffered']
    #allocation3 [shape = 's32[1]{0}', space=sflag, size = 0x4, scoped, tag = 'scoped memory for tpu_custom_call.1']
    #allocation4 [shape = 's32[1]{0}', space=sflag, size = 0x4, scoped, tag = 'scoped memory for tpu_custom_call.1']
    #allocation5 [shape = 'u8[8192]{0}', space=vmem, size = 0x2000, scoped, tag = 'input window, operand 1, single buffered']
    #allocation6 [shape = 's32[1]{0}', space=sflag, size = 0x4, scoped, tag = 'scoped memory for tpu_custom_call.1']
    #allocation7 [shape = 'u8[1024]{0}', space=vmem, size = 0x400, scoped, tag = 'output window, operand 0, single buffered']
    %7 = vsyncpa [#allocation3], 0
    %8 = vsyncpa [#allocation6], 0
    %9 = vsyncpa [#allocation4], 0
    // Predicated region
    $region2: #{tpu_custom_call.1} parent=1 // pred_check
      _
    $region3: #{tpu_custom_call.1} parent=1 // pred_check_branch
      %11 = sbr.rel (0) target = $region5
    $region4: #{tpu_custom_call.1} parent=1 // pred_region
      %s12 = sadd.s32 0, 0
      %s13 = smul.u32 2, %s12
      %s15 = ssub.s32 256, 256
      %16 = vsyncadd [#allocation3], %s15
      %s17 = smul.addr %s13, 128
      %s18 = scalar_lea.hbm %s0, %s17
      %s19 = sshll.u32 [#allocation2], 4
      %s20 = int_to_ptr.vmem [resolvable:$true] %s19
      %25 = dma.hbm_to_vmem [thread:$0]  %s18, 256, %s20, [#allocation3], 128, 128, 8
    $region5: #{tpu_custom_call.1} parent=1 // pred_fallthru
      _
    // Predicated region
    $region6: #{tpu_custom_call.1} parent=1 // pred_check
      _
    $region7: #{tpu_custom_call.1} parent=1 // pred_check_branch
      %27 = sbr.rel (0) target = $region9
    $region8: #{tpu_custom_call.1} parent=1 // pred_region
      %s28 = sadd.s32 0, 0
      %s29 = smul.u32 2, %s28
      %s31 = ssub.s32 256, 256
      %32 = vsyncadd [#allocation6], %s31
      %s33 = smul.addr %s29, 128
      %s34 = scalar_lea.hbm %s1, %s33
      %s35 = sshll.u32 [#allocation5], 4
      %s36 = int_to_ptr.vmem [resolvable:$true] %s35
      %41 = dma.hbm_to_vmem [thread:$0]  %s34, 256, %s36, [#allocation6], 128, 128, 8
    $region9: #{tpu_custom_call.1} parent=1 // pred_fallthru
      _
    // Predicated region
    $region10: #{tpu_custom_call.1} parent=1 // pred_check
      _
    $region11: #{tpu_custom_call.1} parent=1 // pred_check_branch
      %43 = sbr.rel (0) target = $region13
    $region12: #{tpu_custom_call.1} parent=1 // pred_region
      %44 = dma.done [#allocation3], 256
    $region13: #{tpu_custom_call.1} parent=1 // pred_fallthru
      _
    // Predicated region
    $region14: #{tpu_custom_call.1} parent=1 // pred_check
      _
    $region15: #{tpu_custom_call.1} parent=1 // pred_check_branch
      %46 = sbr.rel (0) target = $region17
    $region16: #{tpu_custom_call.1} parent=1 // pred_region
      %47 = dma.done [#allocation6], 256
    $region17: #{tpu_custom_call.1} parent=1 // pred_fallthru
      _
    %s48 = sadd.s32 0, 0
    %s49 = smul.u32 2, %s48
    %s50 = sadd.s32 0, 0
    %s51 = smul.u32 2, %s50
    %s52 = sadd.s32 0, 0
    %p53 = scmp.eq.s32.totalorder 0, 0
    // Predicated region
    $region18: #{tpu_custom_call.1} parent=1 // pred_check
      %p54 = pneg %p53
    $region19: #{tpu_custom_call.1} parent=1 // pred_check_branch
      %56 = sbr.rel (%p54) target = $region21
    $region20: #{tpu_custom_call.1} parent=1 // pred_region
      %57 = vst [vmem:[#allocation7] sm:$0x3] 0.0
    $region21: #{tpu_custom_call.1} parent=1 // pred_fallthru
      _
    %p58 = scmp.lt.s32.totalorder %s52, 1
    // Predicated region
    $region22: #{tpu_custom_call.1} parent=1 // pred_check
      %p59 = pneg %p58
    $region23: #{tpu_custom_call.1} parent=1 // pred_check_branch
      %61 = sbr.rel (%p59) target = $region25
    $region24: #{tpu_custom_call.1} parent=1 // pred_region
      %v62 = vld [vmem:[#allocation2] sm:$0xff]
      %v63 = vld [vmem:[#allocation2 + $0x8] sm:$0xff]
      %v64 = vld [vmem:[#allocation5] sm:$0xff]
      %v65 = vld [vmem:[#allocation5 + $0x8] sm:$0xff]
      %v66 = vmul.f32 %v62, %v64
      %v67 = vmul.f32 %v63, %v65
      %v68 = vadd.f32 %v66, %v67
      %v69 = vrot.slane %v68, 4
      %v70 = vadd.f32 %v68, %v69
      %v71 = vrot.slane %v70, 2
      %v72 = vadd.f32 %v70, %v71
      %v73 = vrot.slane %v72, 1
      %v74 = vadd.f32 %v72, %v73
      %v75 = vadd.f32 %v62, %v64
      %v76 = vadd.f32 %v63, %v65
      %v77 = vadd.f32 %v75, %v76
      %v78 = vrot.slane %v77, 4
      %v79 = vadd.f32 %v77, %v78
      %v80 = vrot.slane %v79, 2
      %v81 = vadd.f32 %v79, %v80
      %v82 = vrot.slane %v81, 1
      %v83 = vadd.f32 %v81, %v82
      %v84 = vld [vmem:[#allocation7] sm:$0x3]
      %vm85 = vcmask 1040384
      %v86 = vsel %vm85, %v74, %v83
      %v87 = vadd.f32 %v84, %v86
      %88 = vst [vmem:[#allocation7] sm:$0x3] %v87
    $region25: #{tpu_custom_call.1} parent=1 // pred_fallthru
      _
    // Predicated region
    $region26: #{tpu_custom_call.1} parent=1 // pred_check
      _
    $region27: #{tpu_custom_call.1} parent=1 // pred_check_branch
      %90 = sbr.rel (0) target = $region29
    $region28: #{tpu_custom_call.1} parent=1 // pred_region
      %s92 = ssub.s32 32, 32
      %93 = vsyncadd [#allocation4], %s92
      %s95 = sshll.u32 [#allocation7], 4
      %s96 = int_to_ptr.vmem [resolvable:$true] %s95
      %98 = dma.vmem_to_hbm [thread:$0]  %s96, 32, %s2, [#allocation4]
    $region29: #{tpu_custom_call.1} parent=1 // pred_fallthru
      _
    // Predicated region
    $region30: #{tpu_custom_call.1} parent=1 // pred_check
      _
    $region31: #{tpu_custom_call.1} parent=1 // pred_check_branch
      %100 = sbr.rel (0) target = $region33
    $region32: #{tpu_custom_call.1} parent=1 // pred_region
      %101 = dma.done [#allocation4], 32
    $region33: #{tpu_custom_call.1} parent=1 // pred_fallthru
      _
    %102 = vsyncpa [#allocation3], 1
    %103 = vsyncpa [#allocation6], 1
    %104 = vsyncpa [#allocation4], 1

</llo_original>
